<compile_context>
chip_gen: v7x
topology: tpu7x:2x2x1
jax: 0.10.0
libtpu: 0.0.40
codegen_flags: <defaults>
</compile_context>

<pallas_src>
import functools

import jax
import jax.numpy as jnp
from jax.experimental import pallas as pl
from jax.experimental.pallas import tpu as pltpu


def _round_up(x, m):
    return ((x + m - 1) // m) * m


def _cdiv(a, b):
    return -(-a // b)


def _vmem_capacity_bytes():
    try:
        return int(pltpu.get_tpu_info().vmem_capacity_bytes)
    except Exception:
        return 64 << 20          # conservative: v7x per-TensorCore VMEM


_VMEM_CAP = _vmem_capacity_bytes()
# Headroom for XLA / IO buffers; allow ~100 MiB on v5e/v6e (128 MiB physical),
# stay well under 64 MiB on v7x.
_VMEM_BUDGET = max(32 << 20, min(_VMEM_CAP - (16 << 20), 100 << 20))


def _fold_min_lanes(acc, dots):
    """Fold a (t, c*128) matmul result into a (t, 128) running-min accumulator
    with pure VPU elementwise minimum over static 128-lane slices (no XLU)."""
    for b in range(dots.shape[-1] // 128):
        acc = jnp.minimum(acc, dots[:, b * 128:(b + 1) * 128])
    return acc


def _resident_kernel(src_ref, tar_ref, min_ref, *, tile_s):
    """grid = (target tiles,).  Whole packed source resident in VMEM; the
    source-chunk reduction runs in-kernel (amortizes grid-step overhead).

    src_ref: (8, n_src_p)   rows 0..d-1 = -2*coords, row 7 = ||s||^2
    tar_ref: (tile_t, 8)    cols 0..d-1 = coords,    col 7 = +1.0
    min_ref: (tile_t, 128)  lane-dense running min of (||s||^2 - 2 t.s)
    """
    n_chunks = src_ref.shape[1] // tile_s
    tar = tar_ref[...]                                    # (tile_t, 8)
    min_ref[...] = jnp.full_like(min_ref, jnp.inf)

    def body(ci, carry):
        start = pl.multiple_of(ci * tile_s, 128)
        chunk = src_ref[:, pl.ds(start, tile_s)]          # (8, tile_s)
        # Single MXU matmul: tar @ chunk = ||s||^2 - 2 t.s (fold trick).
        dots = jnp.dot(tar, chunk, preferred_element_type=jnp.float32)
        min_ref[...] = _fold_min_lanes(min_ref[...], dots)
        return carry

    jax.lax.fori_loop(0, n_chunks, body, 0)


def _stream_kernel(src_ref, tar_ref, min_ref):
    """grid = (target tiles, source chunks); source streamed from HBM.  The
    output block (indexed by target tile only) is the running-min accumulator.
    """
    si = pl.program_id(1)

    @pl.when(si == 0)
    def _():
        min_ref[...] = jnp.full_like(min_ref, jnp.inf)

    dots = jnp.dot(tar_ref[...], src_ref[...],
                   preferred_element_type=jnp.float32)
    min_ref[...] = _fold_min_lanes(min_ref[...], dots)


@functools.partial(jax.jit,
                   static_argnames=("tile_t", "tile_s", "force_stream"))
def reverse_loss(src_V, tar_V, *, tile_t=512, tile_s=2048,
                 force_stream=False):
    """0.5 * sum_j min_i ||src_V[i] - tar_V[j]||^2, computed on TPU."""
    src_V = jnp.asarray(src_V, jnp.float32)
    tar_V = jnp.asarray(tar_V, jnp.float32)
    n_src, d = src_V.shape
    n_tar, d2 = tar_V.shape
    assert d == d2 and 1 <= d <= 7, "coordinate dim must fit in 7 sublanes"

    # >= 8 target tiles when possible (shards the 'parallel' axis across both
    # v7x TensorCores / megacore) while keeping (sublane, lane) alignment.
    tile_t = max(8, min(tile_t, _round_up(_cdiv(n_tar, 8), 8)))
    tile_s = max(128, min(tile_s, _round_up(n_src, 128)))
    assert tile_t % 8 == 0 and tile_s % 128 == 0
    n_tar_p = _round_up(n_tar, tile_t)
    n_src_p = _round_up(n_src, tile_s)

    # Packed transposed source (8, n_src_p); the -2 of the cross term is
    # folded into the coordinates, row 7 carries ||s||^2.  32 B/point.
    s_norm = jnp.sum(src_V * src_V, axis=-1)                  # (n_src,)
    src_p = jnp.zeros((8, n_src), jnp.float32)
    src_p = src_p.at[:d, :].set(-2.0 * src_V.T)
    src_p = src_p.at[7, :].set(s_norm)
    if n_src_p > n_src:
        # Pad by replicating the last real point: duplicates can only tie the
        # min, never change it.
        fill = jnp.broadcast_to(src_p[:, n_src - 1:n_src],
                                (8, n_src_p - n_src))
        src_p = jnp.concatenate([src_p, fill], axis=1)

    # Packed targets (n_tar_p, 8); col 7 = +1.0 picks up the +||s||^2 term.
    # Padding rows stay all-zero; their outputs are dropped in the wrapper.
    tar_p = jnp.zeros((n_tar_p, 8), jnp.float32)
    tar_p = tar_p.at[:n_tar, :d].set(tar_V)
    tar_p = tar_p.at[:n_tar, 7].set(1.0)

    n_t_tiles = n_tar_p // tile_t
    n_s_chunks = n_src_p // tile_s
    out_shape = jax.ShapeDtypeStruct((n_tar_p, 128), jnp.float32)

    # Resident-path VMEM footprint (pipeline double-buffers each BlockSpec
    # operand, including the constant-index source).
    resident_bytes = (2 * (8 * n_src_p * 4)          # resident packed source
                      + 2 * (tile_t * 128 * 4)       # tar tile (lane-padded)
                      + 2 * (tile_t * 128 * 4)       # out tile
                      + 2 * (tile_t * tile_s * 4)    # matmul temporaries
                      + (4 << 20))                   # headroom
    use_resident = (not force_stream) and resident_bytes <= _VMEM_BUDGET

    if use_resident:
        vmem_limit = int(min(max(resident_bytes, 32 << 20), _VMEM_BUDGET))
        m = pl.pallas_call(
            functools.partial(_resident_kernel, tile_s=tile_s),
            out_shape=out_shape,
            grid_spec=pltpu.PrefetchScalarGridSpec(
                num_scalar_prefetch=0,
                grid=(n_t_tiles,),
                in_specs=[
                    # Full source, constant index -> DMA'd once, resident.
                    pl.BlockSpec((8, n_src_p), lambda ti: (0, 0)),
                    # One contiguous target tile per grid step.
                    pl.BlockSpec((tile_t, 8), lambda ti: (ti, 0)),
                ],
                out_specs=pl.BlockSpec((tile_t, 128), lambda ti: (ti, 0)),
            ),
            compiler_params=pltpu.CompilerParams(
                dimension_semantics=("parallel",),
                vmem_limit_bytes=vmem_limit),
        )(src_p, tar_p)
    else:
        # Streaming fallback for source clouds too large to keep resident
        # (notably v7x's 64 MiB VMEM).  Still compute-bound.
        stream_bytes = (2 * (8 * tile_s * 4)
                        + 2 * (tile_t * 128 * 4)
                        + 2 * (tile_t * 128 * 4)
                        + 2 * (tile_t * tile_s * 4)
                        + (4 << 20))
        vmem_limit = int(min(max(stream_bytes, 32 << 20), _VMEM_BUDGET))
        m = pl.pallas_call(
            _stream_kernel,
            out_shape=out_shape,
            grid_spec=pltpu.PrefetchScalarGridSpec(
                num_scalar_prefetch=0,
                grid=(n_t_tiles, n_s_chunks),
                in_specs=[
                    pl.BlockSpec((8, tile_s), lambda ti, si: (0, si)),
                    pl.BlockSpec((tile_t, 8), lambda ti, si: (ti, 0)),
                ],
                out_specs=pl.BlockSpec((tile_t, 128), lambda ti, si: (ti, 0)),
            ),
            compiler_params=pltpu.CompilerParams(
                dimension_semantics=("parallel", "arbitrary"),
                vmem_limit_bytes=vmem_limit),
        )(src_p, tar_p)

    # min_i d2 = ||t||^2 + min_i(||s||^2 - 2 t.s); the 128-wide lane min is
    # finished here (single XLA reduce), padded targets dropped, tiny negative
    # cancellation noise clamped.
    t_norm = jnp.sum(tar_V * tar_V, axis=-1)                  # (n_tar,)
    min_d2 = jnp.maximum(t_norm + jnp.min(m, axis=-1)[:n_tar], 0.0)
    return 0.5 * jnp.sum(min_d2)


def _reference_loss(src_V, tar_V):
    # Exact brute force: what cKDTree-query + gather + 0.5*sum((.)^2) computes.
    d2 = jnp.sum((tar_V[:, None, :] - src_V[None, :, :]) ** 2, axis=-1)
    ii = jnp.argmin(d2, axis=1)
    diff = src_V[ii] - tar_V
    return 0.5 * jnp.sum(diff * diff)


if __name__ == "__main__":
    key = jax.random.PRNGKey(0)
    k1, k2 = jax.random.split(key)
    # Small D=3 vertex clouds; non-multiple sizes exercise the padding paths.
    src_V = jax.random.normal(k1, (512, 3), dtype=jnp.float32)
    tar_V = jax.random.normal(k2, (300, 3), dtype=jnp.float32)

    ref = _reference_loss(src_V, tar_V)

    # Default (resident-source) path.
    loss = reverse_loss(src_V, tar_V)
    jax.block_until_ready(loss)
    assert jnp.allclose(loss, ref, rtol=1e-4, atol=1e-3), (loss, ref)

    # Streaming fallback path (used for very large source clouds).
    loss_s = reverse_loss(src_V, tar_V, force_stream=True)
    jax.block_until_ready(loss_s)
    assert jnp.allclose(loss_s, ref, rtol=1e-4, atol=1e-3), (loss_s, ref)

    print("KERNEL_OK")
</pallas_src>

<mosaic_0001>
module attributes {stable_mosaic.version = 11 : i64} {
  func.func @_resident_kernel(%arg0: i32, %arg1: memref<8x512xf32, #tpu.memory_space<vmem>>, %arg2: memref<40x8xf32, #tpu.memory_space<vmem>>, %arg3: memref<40x128xf32, #tpu.memory_space<vmem>>) attributes {dimension_semantics = [#tpu.dimension_semantics<parallel>], iteration_bounds = array<i64: 8>, scalar_prefetch = 0 : i64, scratch_operands = 0 : i64, tpu.core_type = #tpu.core_type<tc>, window_params = [{pipeline_mode = #tpu.pipeline_mode<synchronous>, transform_indices = @transform_0, window_bounds = array<i64: 8, 512>}, {transform_indices = @transform_1, window_bounds = array<i64: 40, 8>}, {transform_indices = @transform_2, window_bounds = array<i64: 40, 128>}]} {
    %c0 = arith.constant 0 : index
    %c0_0 = arith.constant 0 : index
    %0 = vector.load %arg2[%c0, %c0_0] : memref<40x8xf32, #tpu.memory_space<vmem>>, vector<40x8xf32>
    %cst = arith.constant 0x7F800000 : f32
    %1 = vector.broadcast %cst : f32 to vector<40x128xf32>
    %c0_1 = arith.constant 0 : index
    %c0_2 = arith.constant 0 : index
    %2 = vector.load %arg3[%c0_1, %c0_2] : memref<40x128xf32, #tpu.memory_space<vmem>>, vector<40x128xf32>
    tpu.vector_store %arg3[%c0_1, %c0_2], %1 {strides = array<i32>} : memref<40x128xf32, #tpu.memory_space<vmem>>, vector<40x128xf32>,
    %c0_i32 = arith.constant 0 : i32
    %c512_i32 = arith.constant 512 : i32
    %3 = arith.muli %c0_i32, %c512_i32 : i32
    %4 = tpu.assume_multiple %3, 128 : i32
    %c0_3 = arith.constant 0 : index
    %5 = arith.index_cast %4 : i32 to index
    %6 = vector.load %arg1[%c0_3, %5] : memref<8x512xf32, #tpu.memory_space<vmem>>, vector<8x512xf32>
    %cst_4 = arith.constant dense<0.000000e+00> : vector<40x512xf32>
    %7 = tpu.matmul %0, %6, %cst_4 {dimension_numbers = #tpu.dot_dimension_numbers<[1], [0], [0], [1], [0, 0, 1, 1], [], []>} : vector<40x8xf32>, vector<8x512xf32>, vector<40x512xf32> -> vector<40x512xf32>
    %c0_5 = arith.constant 0 : index
    %c0_6 = arith.constant 0 : index
    %8 = vector.load %arg3[%c0_5, %c0_6] : memref<40x128xf32, #tpu.memory_space<vmem>>, vector<40x128xf32>
    %9 = vector.extract_strided_slice %7 {offsets = [0, 0], sizes = [40, 128], strides = [1, 1]} : vector<40x512xf32> to vector<40x128xf32>
    %10 = arith.minimumf %8, %9 : vector<40x128xf32>
    %11 = vector.extract_strided_slice %7 {offsets = [0, 128], sizes = [40, 128], strides = [1, 1]} : vector<40x512xf32> to vector<40x128xf32>
    %12 = arith.minimumf %10, %11 : vector<40x128xf32>
    %13 = vector.extract_strided_slice %7 {offsets = [0, 256], sizes = [40, 128], strides = [1, 1]} : vector<40x512xf32> to vector<40x128xf32>
    %14 = arith.minimumf %12, %13 : vector<40x128xf32>
    %15 = vector.extract_strided_slice %7 {offsets = [0, 384], sizes = [40, 128], strides = [1, 1]} : vector<40x512xf32> to vector<40x128xf32>
    %16 = arith.minimumf %14, %15 : vector<40x128xf32>
    %c0_7 = arith.constant 0 : index
    %c0_8 = arith.constant 0 : index
    %17 = vector.load %arg3[%c0_7, %c0_8] : memref<40x128xf32, #tpu.memory_space<vmem>>, vector<40x128xf32>
    tpu.vector_store %arg3[%c0_7, %c0_8], %16 {strides = array<i32>} : memref<40x128xf32, #tpu.memory_space<vmem>>, vector<40x128xf32>,
    %c1_i32 = arith.constant 1 : i32
    return
  }
  func.func @transform_0(%arg0: i32) -> (i32, i32) {
    %c0_i32 = arith.constant 0 : i32
    %c0_i32_0 = arith.constant 0 : i32
    %c0_i32_1 = arith.constant 0 : i32
    return %c0_i32, %c0_i32_0 : i32, i32
  }
  func.func @transform_1(%arg0: i32) -> (i32, i32) {
    %c0_i32 = arith.constant 0 : i32
    %c0_i32_0 = arith.constant 0 : i32
    return %arg0, %c0_i32 : i32, i32
  }
  func.func @transform_2(%arg0: i32) -> (i32, i32) {
    %c0_i32 = arith.constant 0 : i32
    %c0_i32_0 = arith.constant 0 : i32
    return %arg0, %c0_i32 : i32, i32
  }
}

</mosaic_0001>

<llo_original>
// kernel: reverse_loss.1
$region0: #{reverse_loss.1}
  #allocation0 [shape = 'u32[]', space=smem, size = 0x4, offset = 0x4, fixed_abs, tag = 'smem constant byte address 0x4 - core index']
  #allocation1 [shape = 'u32[144,128]{1,0:T(1,128)}', space=vmem, size = 0x12000, scoped, tag = 'internal scratch']
  %s0 = inlined_call_operand.vmem [shape: f32[8,512], index: 0, kind: input, shape index: {}]
  %s1 = inlined_call_operand.vmem [shape: f32[320,8], index: 1, kind: input, shape index: {}]
  %s2 = inlined_call_operand.vmem [shape: f32[320,128], index: 2, kind: output, shape index: {}]
  %s3 = sld [smem:[#allocation0]]
  $region41: #{reverse_loss.1} parent=0
    _
  %s5 = ssub.s32 1, %s3
  %s6 = scalar_select 0, %s5, %s3
  loop: start=0, step=1, limit=10
  $region2: #{reverse_loss.1} parent=0 // loop_pre_header
    _
  $region3: #{reverse_loss.1} parent=0 // loop_header
    %s8 = sphi 0, %s12
    %p9 = scmp.ge.s32.totalorder %s8, 10
    %s16 = sphi 0, %s16
    %s18 = sphi 0, %s16
    %s19 = sphi 0, %s18
    %s33 = sphi 0, %s19
    %s39 = sphi 0, %s41
    %s42 = sphi 0, %s39
    %s43 = sphi 0, %s42
    %s59 = sphi 0, %s43
    %s65 = sphi 0, %s67
    %s68 = sphi 0, %s65
    %s69 = sphi 0, %s68
    %s85 = sphi 0, %s69
  $region4: #{reverse_loss.1} parent=0 // loop_header_branch
    %11 = sbr.rel (%p9) target = $region8
  $region5: #{reverse_loss.1} parent=0 // loop_body
    %s13 = ssub.s32 %s8, 1
    %s14 = ssub.s32 %s8, 2
    %s15 = sadd.s32 %s8, 1
    %s17 = sadd.s32 %s16, 1
    %p20 = scmp.eq.s32.totalorder %s8, 7
    %p21 = scmp.ne.s32.totalorder %s16, %s18
    %p22 = scmp.eq.s32.totalorder %s8, 0
    %p23 = por %p21, %p22
    %p24 = scmp.ne.s32.totalorder %s16, %s18
    %p25 = scmp.eq.s32.totalorder %s13, 7
    %p26 = por %p24, %p25
    %p27 = scmp.ne.s32.totalorder %s18, %s19
    %p28 = scmp.eq.s32.totalorder %s13, 0
    %p29 = por %p27, %p28
    %p30 = scmp.ne.s32.totalorder %s18, %s19
    %p31 = scmp.eq.s32.totalorder %s14, 7
    %p32 = por %p30, %p31
    %p34 = scmp.ne.s32.totalorder %s19, %s33
    %p35 = scmp.eq.s32.totalorder %s14, 0
    %p36 = por %p34, %p35
    %s37 = ssub.s32 %s8, %s15
    %p38 = scmp.eq.s32.totalorder %s37, 0
    %s40 = sadd.s32 %s39, 1
    %s41 = scalar_select %p38, %s39, %s40
    %p44 = pneg %p38
    %p45 = scmp.eq.s32.totalorder %s8, 7
    %p46 = por %p44, %p45
    %p47 = scmp.ne.s32.totalorder %s39, %s42
    %p48 = scmp.eq.s32.totalorder %s8, 0
    %p49 = por %p47, %p48
    %p50 = scmp.ne.s32.totalorder %s39, %s42
    %p51 = scmp.eq.s32.totalorder %s13, 7
    %p52 = por %p50, %p51
    %p53 = scmp.ne.s32.totalorder %s42, %s43
    %p54 = scmp.eq.s32.totalorder %s13, 0
    %p55 = por %p53, %p54
    %p56 = scmp.ne.s32.totalorder %s42, %s43
    %p57 = scmp.eq.s32.totalorder %s14, 7
    %p58 = por %p56, %p57
    %p60 = scmp.ne.s32.totalorder %s43, %s59
    %p61 = scmp.eq.s32.totalorder %s14, 0
    %p62 = por %p60, %p61
    %s63 = ssub.s32 %s8, %s15
    %p64 = scmp.eq.s32.totalorder %s63, 0
    %s66 = sadd.s32 %s65, 1
    %s67 = scalar_select %p64, %s65, %s66
    %p70 = pneg %p64
    %p71 = scmp.eq.s32.totalorder %s8, 7
    %p72 = por %p70, %p71
    %p73 = scmp.ne.s32.totalorder %s65, %s68
    %p74 = scmp.eq.s32.totalorder %s8, 0
    %p75 = por %p73, %p74
    %p76 = scmp.ne.s32.totalorder %s65, %s68
    %p77 = scmp.eq.s32.totalorder %s13, 7
    %p78 = por %p76, %p77
    %p79 = scmp.ne.s32.totalorder %s68, %s69
    %p80 = scmp.eq.s32.totalorder %s13, 0
    %p81 = por %p79, %p80
    %p82 = scmp.ne.s32.totalorder %s68, %s69
    %p83 = scmp.eq.s32.totalorder %s14, 7
    %p84 = por %p82, %p83
    %p86 = scmp.ne.s32.totalorder %s69, %s85
    %p87 = scmp.eq.s32.totalorder %s14, 0
    %p88 = por %p86, %p87
    %p89 = scmp.le.s32.totalorder 1, %s8
    %p90 = scmp.lt.s32.totalorder %s8, 9
    %p91 = pnand %p89, %p90
    %p92 = pneg %p91
    // Predicated region
    $region9: #{reverse_loss.1} parent=5 // pred_check
      _
    $region10: #{reverse_loss.1} parent=5 // pred_check_branch
      %94 = sbr.rel (%p91) target = $region12
    $region11: #{reverse_loss.1} parent=5 // pred_region
      %s95 = ssub.s32 %s8, 1
      // Predicated region
      $region13: #{reverse_loss.1} parent=11 // pred_check
        %p96 = pneg %p29
      $region14: #{reverse_loss.1} parent=11 // pred_check_branch
        %98 = sbr.rel (%p96) target = $region16
      $region15: #{reverse_loss.1} parent=11 // pred_region
        _
      $region16: #{reverse_loss.1} parent=11 // pred_fallthru
        _
    $region12: #{reverse_loss.1} parent=5 // pred_fallthru
      _
    %p99 = scmp.lt.s32.totalorder %s8, 8
    // Predicated region
    $region17: #{reverse_loss.1} parent=5 // pred_check
      %p100 = pneg %p99
    $region18: #{reverse_loss.1} parent=5 // pred_check_branch
      %102 = sbr.rel (%p100) target = $region20
    $region19: #{reverse_loss.1} parent=5 // pred_region
      // Predicated region
      $region21: #{reverse_loss.1} parent=19 // pred_check
        %p103 = pneg %p49
      $region22: #{reverse_loss.1} parent=19 // pred_check_branch
        %105 = sbr.rel (%p103) target = $region24
      $region23: #{reverse_loss.1} parent=19 // pred_region
        %s106 = smul.u32 5, %s8
        %p107 = scmp.lt.s32.totalorder %s106, 39
        %s108 = scalar_select %p107, %s106, 39
        %s109 = smul.addr %s108, 8
        %s110 = scalar_lea.vmem %s1, %s109
        %s111 = smul.u32 5, %s8
      $region24: #{reverse_loss.1} parent=19 // pred_fallthru
        _
    $region20: #{reverse_loss.1} parent=5 // pred_fallthru
      _
    %p112 = scmp.le.s32.totalorder 1, %s8
    %p113 = scmp.lt.s32.totalorder %s8, 9
    %p114 = pnand %p112, %p113
    %p115 = pneg %p114
    // Predicated region
    $region25: #{reverse_loss.1} parent=5 // pred_check
      _
    $region26: #{reverse_loss.1} parent=5 // pred_check_branch
      %117 = sbr.rel (%p114) target = $region28
    $region27: #{reverse_loss.1} parent=5 // pred_region
      %s118 = ssub.s32 %s8, 1
      %p119 = pneg %p29
      %p120 = pneg %p26
      %s121 = smul.u32 5, %s13
      %p122 = scmp.lt.s32.totalorder %s121, 39
      %s123 = scalar_select %p122, %s121, 39
      %s124 = smul.addr %s123, 8
      %s125 = scalar_lea.vmem %s1, %s124
      %p126 = pneg %p55
      %p127 = pneg %p52
      %p128 = pneg %p81
      %p129 = pneg %p78
      %s130 = smul.u32 5, %s13
      %p131 = scmp.lt.s32.totalorder %s130, 39
      %s132 = scalar_select %p131, %s130, 39
      %s133 = smul.addr %s132, 8
      %s134 = scalar_lea.vmem %s2, %s133
      %s135 = smul.u32 5, %s13
      %p136 = scmp.lt.s32.totalorder %s135, 39
      %s137 = scalar_select %p136, %s135, 39
      %s138 = smul.addr %s137, 8
      %s139 = scalar_lea.vmem %s1, %s138
      %s140 = smul.u32 5, %s13
      %s141 = smul.u32 5, %s13
      %p142 = scmp.lt.s32.totalorder %s141, 39
      %s143 = scalar_select %p142, %s141, 39
      %s144 = smul.addr %s143, 8
      %s145 = scalar_lea.vmem %s2, %s144
      %s146 = smul.u32 5, %s13
      %v147 = vld [vmem:[%s139] sm:$0xff]
      %v148 = vld [vmem:[%s139 + $0x8] sm:$0xff]
      %v149 = vld [vmem:[%s139 + $0x10] sm:$0xff]
      %v150 = vld [vmem:[%s139 + $0x18] sm:$0xff]
      %v151 = vld [vmem:[%s139 + $0x20] sm:$0xff]
      %152 = vst [vmem:[%s145] sm:$0xff] inf
      %153 = vst [vmem:[%s145 + $0x8] sm:$0xff] inf
      %154 = vst [vmem:[%s145 + $0x10] sm:$0xff] inf
      %155 = vst [vmem:[%s145 + $0x18] sm:$0xff] inf
      %156 = vst [vmem:[%s145 + $0x20] sm:$0xff] inf
      %v157 = vld [vmem:[%s0] sm:$0xff]
      %v158 = vld [vmem:[%s0 + $0x8] sm:$0xff]
      %v159 = vld [vmem:[%s0 + $0x10] sm:$0xff]
      %v160 = vld [vmem:[%s0 + $0x18] sm:$0xff]
      %vm161 = vcmask 64512
      %v163 = vsel %vm161, %v147, 0
      %v166 = vsel %vm161, %v148, 0
      %v169 = vsel %vm161, %v149, 0
      %v172 = vsel %vm161, %v150, 0
      %v175 = vsel %vm161, %v151, 0
      %177 = vmatprep.subr.mxu0 %v158
      %178 = vmatpush1.msra.mxu0 %v157
      %179 = vmatprep.subr.mxu0 0.0
      %180 = vmatpush1.msra.mxu0 0.0
      %181 = vmatprep.subr.mxu0 0.0
      %182 = vmatpush1.msra.mxu0 0.0
      %183 = vmatprep.subr.mxu0 0.0
      %184 = vmatpush1.msra.mxu0 0.0
      %185 = vmatprep.subr.mxu0 0.0
      %186 = vmatpush1.msra.mxu0 0.0
      %187 = vmatprep.subr.mxu0 0.0
      %188 = vmatpush1.msra.mxu0 0.0
      %189 = vmatprep.subr.mxu0 0.0
      %190 = vmatpush1.msra.mxu0 0.0
      %191 = vmatprep.subr.mxu0 0.0
      %192 = vmatpush1.msra.mxu0 0.0
      %193 = vmatprep.subr.mxu0 0.0
      %194 = vmatpush1.msra.mxu0 0.0
      %195 = vmatprep.subr.mxu0 0.0
      %196 = vmatpush1.msra.mxu0 0.0
      %197 = vmatprep.subr.mxu0 0.0
      %198 = vmatpush1.msra.mxu0 0.0
      %199 = vmatprep.subr.mxu0 0.0
      %200 = vmatpush1.msra.mxu0 0.0
      %201 = vmatprep.subr.mxu0 0.0
      %202 = vmatpush1.msra.mxu0 0.0
      %203 = vmatprep.subr.mxu0 0.0
      %204 = vmatpush1.msra.mxu0 0.0
      %205 = vmatprep.subr.mxu0 0.0
      %206 = vmatpush1.msra.mxu0 0.0
      %207 = vmatprep.subr.mxu0 0.0
      %208 = vmatpush1.msra.mxu0 0.0
      %209 = vmatprep.subr.mxu0 0.0
      %210 = vmatpush1.msra.mxu0 0.0
      %211 = vmatprep.subr.mxu0 0.0
      %212 = vmatpush1.msra.mxu0 0.0
      %213 = vmatprep.subr.mxu0 0.0
      %214 = vmatpush1.msra.mxu0 0.0
      %215 = vmatprep.subr.mxu0 0.0
      %216 = vmatpush1.msra.mxu0 0.0
      %217 = vmatprep.subr.mxu0 0.0
      %218 = vmatpush1.msra.mxu0 0.0
      %219 = vmatprep.subr.mxu0 0.0
      %220 = vmatpush1.msra.mxu0 0.0
      %221 = vmatprep.subr.mxu0 0.0
      %222 = vmatpush1.msra.mxu0 0.0
      %223 = vmatprep.subr.mxu0 0.0
      %224 = vmatpush1.msra.mxu0 0.0
      %225 = vmatprep.subr.mxu0 0.0
      %226 = vmatpush1.msra.mxu0 0.0
      %227 = vmatprep.subr.mxu0 0.0
      %228 = vmatpush1.msra.mxu0 0.0
      %229 = vmatprep.subr.mxu0 0.0
      %230 = vmatpush1.msra.mxu0 0.0
      %231 = vmatprep.subr.mxu0 0.0
      %232 = vmatpush1.msra.mxu0 0.0
      %233 = vmatprep.subr.mxu0 0.0
      %234 = vmatpush1.msra.mxu0 0.0
      %235 = vmatprep.subr.mxu0 0.0
      %236 = vmatpush1.msra.mxu0 0.0
      %237 = vmatprep.subr.mxu0 0.0
      %238 = vmatpush1.msra.mxu0 0.0
      %239 = vmatprep.subr.mxu0 0.0
      %240 = vmatpush1.msra.mxu0 0.0
      %241 = vmatprep.mubr.f32.mxu0 0.0
      %242 = vmatmul.mubr.f32.gmra.mrb[0].mxu0 %v163
      %v243 = vpop.f32.mrb[0].mxu0
      %v244 = vadd.f32 0.0, %v243
      %v245 = vpop.f32.mrb[0].mxu0
      %v246 = vadd.f32 0.0, %v245
      %247 = vmatprep.mubr.f32.mxu0 0.0
      %248 = vmatmul.mubr.f32.gmra.mrb[0].mxu0 %v166
      %v249 = vpop.f32.mrb[0].mxu0
      %v250 = vadd.f32 0.0, %v249
      %v251 = vpop.f32.mrb[0].mxu0
      %v252 = vadd.f32 0.0, %v251
      %253 = vmatprep.mubr.f32.mxu0 0.0
      %254 = vmatmul.mubr.f32.gmra.mrb[0].mxu0 %v169
      %v255 = vpop.f32.mrb[0].mxu0
      %v256 = vadd.f32 0.0, %v255
      %v257 = vpop.f32.mrb[0].mxu0
      %v258 = vadd.f32 0.0, %v257
      %259 = vmatprep.mubr.f32.mxu0 0.0
      %260 = vmatmul.mubr.f32.gmra.mrb[0].mxu0 %v172
      %v261 = vpop.f32.mrb[0].mxu0
      %v262 = vadd.f32 0.0, %v261
      %v263 = vpop.f32.mrb[0].mxu0
      %v264 = vadd.f32 0.0, %v263
      %265 = vmatprep.mubr.f32.mxu0 0.0
      %266 = vmatmul.mubr.f32.gmra.mrb[0].mxu0 %v175
      %v267 = vpop.f32.mrb[0].mxu0
      %v268 = vadd.f32 0.0, %v267
      %v269 = vpop.f32.mrb[0].mxu0
      %v270 = vadd.f32 0.0, %v269
      %271 = vdwg.mxu0
      %272 = vmatprep.subr.mxu0 %v160
      %273 = vmatpush1.msra.mxu0 %v159
      %274 = vmatprep.subr.mxu0 0.0
      %275 = vmatpush1.msra.mxu0 0.0
      %276 = vmatprep.subr.mxu0 0.0
      %277 = vmatpush1.msra.mxu0 0.0
      %278 = vmatprep.subr.mxu0 0.0
      %279 = vmatpush1.msra.mxu0 0.0
      %280 = vmatprep.subr.mxu0 0.0
      %281 = vmatpush1.msra.mxu0 0.0
      %282 = vmatprep.subr.mxu0 0.0
      %283 = vmatpush1.msra.mxu0 0.0
      %284 = vmatprep.subr.mxu0 0.0
      %285 = vmatpush1.msra.mxu0 0.0
      %286 = vmatprep.subr.mxu0 0.0
      %287 = vmatpush1.msra.mxu0 0.0
      %288 = vmatprep.subr.mxu0 0.0
      %289 = vmatpush1.msra.mxu0 0.0
      %290 = vmatprep.subr.mxu0 0.0
      %291 = vmatpush1.msra.mxu0 0.0
      %292 = vmatprep.subr.mxu0 0.0
      %293 = vmatpush1.msra.mxu0 0.0
      %294 = vmatprep.subr.mxu0 0.0
      %295 = vmatpush1.msra.mxu0 0.0
      %296 = vmatprep.subr.mxu0 0.0
      %297 = vmatpush1.msra.mxu0 0.0
      %298 = vmatprep.subr.mxu0 0.0
      %299 = vmatpush1.msra.mxu0 0.0
      %300 = vmatprep.subr.mxu0 0.0
      %301 = vmatpush1.msra.mxu0 0.0
      %302 = vmatprep.subr.mxu0 0.0
      %303 = vmatpush1.msra.mxu0 0.0
      %304 = vmatprep.subr.mxu0 0.0
      %305 = vmatpush1.msra.mxu0 0.0
      %306 = vmatprep.subr.mxu0 0.0
      %307 = vmatpush1.msra.mxu0 0.0
      %308 = vmatprep.subr.mxu0 0.0
      %309 = vmatpush1.msra.mxu0 0.0
      %310 = vmatprep.subr.mxu0 0.0
      %311 = vmatpush1.msra.mxu0 0.0
      %312 = vmatprep.subr.mxu0 0.0
      %313 = vmatpush1.msra.mxu0 0.0
      %314 = vmatprep.subr.mxu0 0.0
      %315 = vmatpush1.msra.mxu0 0.0
      %316 = vmatprep.subr.mxu0 0.0
      %317 = vmatpush1.msra.mxu0 0.0
      %318 = vmatprep.subr.mxu0 0.0
      %319 = vmatpush1.msra.mxu0 0.0
      %320 = vmatprep.subr.mxu0 0.0
      %321 = vmatpush1.msra.mxu0 0.0
      %322 = vmatprep.subr.mxu0 0.0
      %323 = vmatpush1.msra.mxu0 0.0
      %324 = vmatprep.subr.mxu0 0.0
      %325 = vmatpush1.msra.mxu0 0.0
      %326 = vmatprep.subr.mxu0 0.0
      %327 = vmatpush1.msra.mxu0 0.0
      %328 = vmatprep.subr.mxu0 0.0
      %329 = vmatpush1.msra.mxu0 0.0
      %330 = vmatprep.subr.mxu0 0.0
      %331 = vmatpush1.msra.mxu0 0.0
      %332 = vmatprep.subr.mxu0 0.0
      %333 = vmatpush1.msra.mxu0 0.0
      %334 = vmatprep.subr.mxu0 0.0
      %335 = vmatpush1.msra.mxu0 0.0
      %336 = vmatprep.mubr.f32.mxu0 0.0
      %337 = vmatmul.mubr.f32.gmra.mrb[0].mxu0 %v163
      %v338 = vpop.f32.mrb[0].mxu0
      %v339 = vadd.f32 0.0, %v338
      %v340 = vpop.f32.mrb[0].mxu0
      %v341 = vadd.f32 0.0, %v340
      %342 = vmatprep.mubr.f32.mxu0 0.0
      %343 = vmatmul.mubr.f32.gmra.mrb[0].mxu0 %v166
      %v344 = vpop.f32.mrb[0].mxu0
      %v345 = vadd.f32 0.0, %v344
      %v346 = vpop.f32.mrb[0].mxu0
      %v347 = vadd.f32 0.0, %v346
      %348 = vmatprep.mubr.f32.mxu0 0.0
      %349 = vmatmul.mubr.f32.gmra.mrb[0].mxu0 %v169
      %v350 = vpop.f32.mrb[0].mxu0
      %v351 = vadd.f32 0.0, %v350
      %v352 = vpop.f32.mrb[0].mxu0
      %v353 = vadd.f32 0.0, %v352
      %354 = vmatprep.mubr.f32.mxu0 0.0
      %355 = vmatmul.mubr.f32.gmra.mrb[0].mxu0 %v172
      %v356 = vpop.f32.mrb[0].mxu0
      %v357 = vadd.f32 0.0, %v356
      %v358 = vpop.f32.mrb[0].mxu0
      %v359 = vadd.f32 0.0, %v358
      %360 = vmatprep.mubr.f32.mxu0 0.0
      %361 = vmatmul.mubr.f32.gmra.mrb[0].mxu0 %v175
      %v362 = vpop.f32.mrb[0].mxu0
      %v363 = vadd.f32 0.0, %v362
      %v364 = vpop.f32.mrb[0].mxu0
      %v365 = vadd.f32 0.0, %v364
      %366 = vdwg.mxu0
      %v367 = vld [vmem:[%s145] sm:$0xff]
      %v368 = vld [vmem:[%s145 + $0x8] sm:$0xff]
      %v369 = vld [vmem:[%s145 + $0x10] sm:$0xff]
      %v370 = vld [vmem:[%s145 + $0x18] sm:$0xff]
      %v371 = vld [vmem:[%s145 + $0x20] sm:$0xff]
      %v372 = vmin.f32 %v367, %v244
      %v373 = vmin.f32 %v368, %v250
      %v374 = vmin.f32 %v369, %v256
      %v375 = vmin.f32 %v370, %v262
      %v376 = vmin.f32 %v371, %v268
      %v377 = vmin.f32 %v372, %v246
      %v378 = vmin.f32 %v373, %v252
      %v379 = vmin.f32 %v374, %v258
      %v380 = vmin.f32 %v375, %v264
      %v381 = vmin.f32 %v376, %v270
      %v382 = vmin.f32 %v377, %v339
      %v383 = vmin.f32 %v378, %v345
      %v384 = vmin.f32 %v379, %v351
      %v385 = vmin.f32 %v380, %v357
      %v386 = vmin.f32 %v381, %v363
      %v387 = vmin.f32 %v382, %v341
      %v388 = vmin.f32 %v383, %v347
      %v389 = vmin.f32 %v384, %v353
      %v390 = vmin.f32 %v385, %v359
      %v391 = vmin.f32 %v386, %v365
      %392 = vst [vmem:[%s145] sm:$0xff] %v387
      %393 = vst [vmem:[%s145 + $0x8] sm:$0xff] %v388
      %394 = vst [vmem:[%s145 + $0x10] sm:$0xff] %v389
      %395 = vst [vmem:[%s145 + $0x18] sm:$0xff] %v390
      %396 = vst [vmem:[%s145 + $0x20] sm:$0xff] %v391
      %s397 = smul.u32 5, %s13
      %p398 = scmp.lt.s32.totalorder %s397, 39
      %s399 = scalar_select %p398, %s397, 39
      %s400 = smul.addr %s399, 8
      %s401 = scalar_lea.vmem %s2, %s400
      // Predicated region
      $region29: #{reverse_loss.1} parent=27 // pred_check
        %p402 = pneg %p78
      $region30: #{reverse_loss.1} parent=27 // pred_check_branch
        %404 = sbr.rel (%p402) target = $region32
      $region31: #{reverse_loss.1} parent=27 // pred_region
        %s405 = smul.u32 5, %s13
      $region32: #{reverse_loss.1} parent=27 // pred_fallthru
        _
    $region28: #{reverse_loss.1} parent=5 // pred_fallthru
      _
    %p406 = scmp.le.s32.totalorder 2, %s8
    // Predicated region
    $region33: #{reverse_loss.1} parent=5 // pred_check
      %p407 = pneg %p406
    $region34: #{reverse_loss.1} parent=5 // pred_check_branch
      %409 = sbr.rel (%p407) target = $region36
    $region35: #{reverse_loss.1} parent=5 // pred_region
      %s410 = ssub.s32 %s8, 2
      // Predicated region
      $region37: #{reverse_loss.1} parent=35 // pred_check
        %p411 = pneg %p84
      $region38: #{reverse_loss.1} parent=35 // pred_check_branch
        %413 = sbr.rel (%p411) target = $region40
      $region39: #{reverse_loss.1} parent=35 // pred_region
        %s414 = smul.u32 5, %s14
        %p415 = scmp.lt.s32.totalorder %s414, 39
        %s416 = scalar_select %p415, %s414, 39
        %s417 = smul.addr %s416, 8
        %s418 = scalar_lea.vmem %s2, %s417
      $region40: #{reverse_loss.1} parent=35 // pred_fallthru
        _
    $region36: #{reverse_loss.1} parent=5 // pred_fallthru
      _
  $region6: #{reverse_loss.1} parent=0 // loop_footer
    %s12 = sadd.s32 1, %s8
  $region7: #{reverse_loss.1} parent=0 // loop_footer_branch
    %7 = sbr.rel target = $region3
  $region8: #{reverse_loss.1} parent=0 // loop_exit
    _

</llo_original>
